<compile_context>
chip_gen: v5e
topology: v5e:2x2
jax: 0.10.0
libtpu: 0.0.40
codegen_flags: <defaults>
</compile_context>

<pallas_src>
import numpy as np
import jax
import jax.numpy as jnp
from jax.experimental import pallas as pl
from jax.experimental.pallas import tpu as pltpu


def _gaussian_1d(scale):
    """1-D normalized Gaussian taps; the PyTorch buffer is exactly the outer
    product of this vector with itself (AntiAliasDownsample2d.__init__).
    ksize is always odd, so ka == kb."""
    sigma = (1.0 / scale - 1.0) / 2.0
    ksize = 2 * round(sigma * 4) + 1
    ka = ksize // 2
    xs = np.arange(ksize, dtype=np.float64)
    mean = (ksize - 1) / 2.0
    g = np.exp(-((xs - mean) ** 2) / (2.0 * sigma ** 2))
    g = g / g.sum()
    return g.astype(np.float32), ka


def _band_matrix(n_in, n_out, stride, taps, ka):
    """B[j, jo] = taps[j - stride*jo + ka] (0 where the tap lands in the zero
    padding), so (pad(x) conv taps)[::stride] == x @ B exactly."""
    K = taps.shape[0]
    B = np.zeros((n_in, n_out), dtype=np.float32)
    for jo in range(n_out):
        for kw in range(K):
            j = stride * jo + kw - ka
            if 0 <= j < n_in:
                B[j, jo] = taps[kw]
    return B


def _make_pyramid_kernel(num_levels, tc, H, W, compute_dtype):
    """Kernel computing every downsampled level from one resident (tc, H, W)
    channel-block, using two batched MXU contractions per level."""

    def kernel(x_ref, *refs):
        mat_refs = refs[: 2 * num_levels]
        out_refs = refs[2 * num_levels:]

        x = x_ref[0]                                  # (tc, H, W)
        if x.dtype != compute_dtype:
            x = x.astype(compute_dtype)
        xf = x.reshape(tc * H, W)                     # fat MXU LHS for pass 1

        for li in range(num_levels):
            bvt = mat_refs[2 * li][...]               # (Ho, H)
            bh = mat_refs[2 * li + 1][...]            # (W, Wo)
            Ho = bvt.shape[0]
            Wo = bh.shape[1]

            # Horizontal blur+downsample: one (tc*H, W) @ (W, Wo) matmul.
            t = jnp.dot(xf, bh, preferred_element_type=jnp.float32)
            t = t.reshape(tc, H, Wo)                  # (tc, H, Wo), f32

            # Vertical blur+downsample: one batched matmul contracting H.
            bvt_b = jnp.broadcast_to(bvt.astype(jnp.float32)[None],
                                     (tc, Ho, H))     # tiny constant broadcast
            o = jnp.einsum('coh,chw->cow', bvt_b, t,
                           preferred_element_type=jnp.float32)  # (tc, Ho, Wo)

            # Single full-block store (no per-channel masked partial stores).
            out_refs[li][0] = o.astype(out_refs[li].dtype)

    return kernel


def image_pyramid(x, num_pyramids, *, channel_block=None):
    """Pallas equivalent of ImagePyramid.forward -> list of arrays."""
    N, C, H, W = x.shape
    if num_pyramids <= 0:
        return []
    res = [x]                         # level 0: scale == 1.0 returns the input
    if num_pyramids == 1:
        return res

    # bf16/f16 inputs feed the MXU natively (f32 accumulation); otherwise f32.
    if x.dtype in (jnp.dtype(jnp.bfloat16), jnp.dtype(jnp.float16)):
        compute_dtype = jnp.dtype(x.dtype)
    else:
        compute_dtype = jnp.dtype(jnp.float32)
    in_bytes = x.dtype.itemsize
    out_bytes = in_bytes
    mat_bytes = compute_dtype.itemsize

    # Per-level banded blur+downsample matrices (compile-time constants).
    num_levels = num_pyramids - 1
    np_mats, level_dims = [], []
    for p in range(1, num_pyramids):
        scale = 1.0 / (2 ** p)
        taps, ka = _gaussian_1d(scale)
        s = int(round(1.0 / scale))
        Ho, Wo = -(-H // s), -(-W // s)
        BvT = np.ascontiguousarray(_band_matrix(H, Ho, s, taps, ka).T)  # (Ho,H)
        Bh = _band_matrix(W, Wo, s, taps, ka)                           # (W,Wo)
        np_mats.append((BvT, Bh))
        level_dims.append((Ho, Wo))

    # --- VMEM budgeting: size tc against physical VMEM per generation.
    try:
        vmem_cap = int(pltpu.get_tpu_info().vmem_capacity_bytes)
    except Exception:
        vmem_cap = 64 << 20            # v7x lower bound; safe everywhere
    vmem_budget = int(0.6 * vmem_cap)  # leave headroom for double-buffering etc.

    def vmem_estimate(tc):
        est = 2 * tc * H * W * in_bytes                        # input (x2 buf)
        for Ho, Wo in level_dims:
            est += 2 * tc * Ho * Wo * out_bytes                # outputs (x2 buf)
            est += 2 * (Ho * H + W * Wo) * mat_bytes           # mats (x2 buf)
            est += tc * (H * Wo + 2 * Ho * Wo + Ho * H) * 4    # live f32 temps
        return int(est * 1.25)                                 # safety margin

    divisors = [d for d in range(C, 0, -1) if C % d == 0]
    if channel_block is not None:
        tc = channel_block
    else:
        tc = 1
        for d in divisors:             # largest channel block that fits VMEM
            if vmem_estimate(d) <= vmem_budget:
                tc = d
                break
        # Keep >= 2 parallel grid steps when possible (v7x has 2 TensorCores).
        if N * (C // tc) < 2:
            for d in divisors:
                if d < tc and vmem_estimate(d) <= vmem_budget and N * (C // d) >= 2:
                    tc = d
                    break
    assert C % tc == 0, "channel_block must divide C"

    vmem_limit = int(min(0.9 * vmem_cap, max(4 * vmem_estimate(tc), 64 << 20)))

    # Specs. Band matrices are small compile-time constants shared by every
    # grid step (constant index_map).
    # TODO(synk): mark mat_specs pipeline_mode=pl.Buffered(1) (constant index
    # map needs no double-buffer) and add a halo'd output-row (H) grid axis for
    # very large images so the (1,tc,H,W) block fits v7x's 64 MiB VMEM and the
    # vertical band only spans s*tile_Ho + K input rows.
    mats, mat_specs, out_shapes, out_specs = [], [], [], []
    for (BvT, Bh), (Ho, Wo) in zip(np_mats, level_dims):
        mats.append(jnp.asarray(BvT, dtype=compute_dtype))
        mats.append(jnp.asarray(Bh, dtype=compute_dtype))
        mat_specs.append(pl.BlockSpec((Ho, H), lambda n, cb: (0, 0)))
        mat_specs.append(pl.BlockSpec((W, Wo), lambda n, cb: (0, 0)))
        out_shapes.append(jax.ShapeDtypeStruct((N, C, Ho, Wo), x.dtype))
        out_specs.append(pl.BlockSpec((1, tc, Ho, Wo), lambda n, cb: (n, cb, 0, 0)))

    outs = pl.pallas_call(
        _make_pyramid_kernel(num_levels, tc, H, W, compute_dtype),
        out_shape=tuple(out_shapes),
        grid=(N, C // tc),
        in_specs=[pl.BlockSpec((1, tc, H, W), lambda n, cb: (n, cb, 0, 0))] + mat_specs,
        out_specs=tuple(out_specs),
        compiler_params=pltpu.CompilerParams(
            dimension_semantics=("parallel", "parallel"),
            vmem_limit_bytes=vmem_limit),
    )(x, *mats)

    res.extend(list(outs))
    return res


def _reference_downsample(x, scale):
    """Pure-JAX reference: pad -> depthwise 2D conv -> strided slice,
    mirroring the PyTorch forward exactly."""
    if scale == 1.0:
        return x
    N, C, H, W = x.shape
    sigma = (1.0 / scale - 1.0) / 2.0
    ksize = 2 * round(sigma * 4) + 1
    ka = ksize // 2
    kb = ka - 1 if ksize % 2 == 0 else ka
    xs = np.arange(ksize, dtype=np.float32)
    mean = (ksize - 1) / 2.0
    g1 = np.exp(-((xs - mean) ** 2) / (2.0 * sigma ** 2)).astype(np.float32)
    k2 = np.outer(g1, g1)
    k2 = (k2 / k2.sum()).astype(np.float32)
    w = jnp.broadcast_to(jnp.asarray(k2)[None, None], (C, 1, ksize, ksize))
    out = jax.lax.conv_general_dilated(
        x, w, window_strides=(1, 1), padding=((ka, kb), (ka, kb)),
        dimension_numbers=("NCHW", "OIHW", "NCHW"), feature_group_count=C)
    s = int(round(1.0 / scale))
    return out[:, :, ::s, ::s]


if __name__ == "__main__":
    key = jax.random.PRNGKey(0)
    x = jax.random.normal(key, (2, 4, 16, 16), dtype=jnp.float32)
    num_pyramids = 3

    res = image_pyramid(x, num_pyramids)
    res = jax.block_until_ready(res)

    # sanity check vs pure-JAX reference
    for p in range(num_pyramids):
        ref = _reference_downsample(x, 1.0 / (2 ** p))
        np.testing.assert_allclose(np.asarray(res[p]), np.asarray(ref),
                                   rtol=1e-5, atol=1e-5)

    print("KERNEL_OK")
</pallas_src>

<mosaic_0001>
module attributes {stable_mosaic.version = 11 : i64} {
  func.func @kernel(%arg0: i32, %arg1: i32, %arg2: memref<1x4x16x16xf32, #tpu.memory_space<vmem>>, %arg3: memref<8x16xf32, #tpu.memory_space<vmem>>, %arg4: memref<16x8xf32, #tpu.memory_space<vmem>>, %arg5: memref<4x16xf32, #tpu.memory_space<vmem>>, %arg6: memref<16x4xf32, #tpu.memory_space<vmem>>, %arg7: memref<1x4x8x8xf32, #tpu.memory_space<vmem>>, %arg8: memref<1x4x4x4xf32, #tpu.memory_space<vmem>>) attributes {dimension_semantics = [#tpu.dimension_semantics<parallel>, #tpu.dimension_semantics<parallel>], iteration_bounds = array<i64: 2, 1>, scalar_prefetch = 0 : i64, scratch_operands = 0 : i64, tpu.core_type = #tpu.core_type<tc>, window_params = [{transform_indices = @transform_0, window_bounds = array<i64: 1, 4, 16, 16>}, {pipeline_mode = #tpu.pipeline_mode<synchronous>, transform_indices = @transform_1, window_bounds = array<i64: 8, 16>}, {pipeline_mode = #tpu.pipeline_mode<synchronous>, transform_indices = @transform_2, window_bounds = array<i64: 16, 8>}, {pipeline_mode = #tpu.pipeline_mode<synchronous>, transform_indices = @transform_3, window_bounds = array<i64: 4, 16>}, {pipeline_mode = #tpu.pipeline_mode<synchronous>, transform_indices = @transform_4, window_bounds = array<i64: 16, 4>}, {transform_indices = @transform_5, window_bounds = array<i64: 1, 4, 8, 8>}, {transform_indices = @transform_6, window_bounds = array<i64: 1, 4, 4, 4>}]} {
    %c0 = arith.constant 0 : index
    %c0_0 = arith.constant 0 : index
    %c0_1 = arith.constant 0 : index
    %c0_2 = arith.constant 0 : index
    %0 = vector.load %arg2[%c0, %c0_0, %c0_1, %c0_2] : memref<1x4x16x16xf32, #tpu.memory_space<vmem>>, vector<1x4x16x16xf32>
    %1 = vector.shape_cast %0 : vector<1x4x16x16xf32> to vector<4x16x16xf32>
    %2 = vector.shape_cast %1 : vector<4x16x16xf32> to vector<64x16xf32>
    %c0_3 = arith.constant 0 : index
    %c0_4 = arith.constant 0 : index
    %3 = vector.load %arg3[%c0_3, %c0_4] : memref<8x16xf32, #tpu.memory_space<vmem>>, vector<8x16xf32>
    %c0_5 = arith.constant 0 : index
    %c0_6 = arith.constant 0 : index
    %4 = vector.load %arg4[%c0_5, %c0_6] : memref<16x8xf32, #tpu.memory_space<vmem>>, vector<16x8xf32>
    %cst = arith.constant dense<0.000000e+00> : vector<64x8xf32>
    %5 = tpu.matmul %2, %4, %cst {dimension_numbers = #tpu.dot_dimension_numbers<[1], [0], [0], [1], [0, 0, 1, 1], [], []>} : vector<64x16xf32>, vector<16x8xf32>, vector<64x8xf32> -> vector<64x8xf32>
    %6 = vector.shape_cast %5 : vector<64x8xf32> to vector<4x16x8xf32>
    %7 = vector.shape_cast %3 : vector<8x16xf32> to vector<1x8x16xf32>
    %8 = vector.shape_cast %7 : vector<1x8x16xf32> to vector<1x8x16xf32>
    %9 = vector.broadcast %8 : vector<1x8x16xf32> to vector<4x8x16xf32>
    "tpu.trace_start"() <{level = 10 : i32, message = "coh,chw->cow"}> : () -> ()
    %cst_7 = arith.constant dense<0.000000e+00> : vector<4x8x8xf32>
    %10 = tpu.matmul %9, %6, %cst_7 {dimension_numbers = #tpu.dot_dimension_numbers<[2], [1], [1], [2], [0, 0, 0, 1, 1, 2], [0], [0]>} : vector<4x8x16xf32>, vector<4x16x8xf32>, vector<4x8x8xf32> -> vector<4x8x8xf32>
    "tpu.trace_stop"() : () -> ()
    %c0_8 = arith.constant 0 : index
    %c0_9 = arith.constant 0 : index
    %c0_10 = arith.constant 0 : index
    %c0_11 = arith.constant 0 : index
    %11 = vector.load %arg7[%c0_8, %c0_9, %c0_10, %c0_11] : memref<1x4x8x8xf32, #tpu.memory_space<vmem>>, vector<1x4x8x8xf32>
    %12 = vector.shape_cast %11 : vector<1x4x8x8xf32> to vector<4x8x8xf32>
    %13 = vector.shape_cast %10 : vector<4x8x8xf32> to vector<1x4x8x8xf32>
    tpu.vector_store %arg7[%c0_8, %c0_9, %c0_10, %c0_11], %13 {strides = array<i32>} : memref<1x4x8x8xf32, #tpu.memory_space<vmem>>, vector<1x4x8x8xf32>,
    %c0_12 = arith.constant 0 : index
    %c0_13 = arith.constant 0 : index
    %14 = vector.load %arg5[%c0_12, %c0_13] : memref<4x16xf32, #tpu.memory_space<vmem>>, vector<4x16xf32>
    %c0_14 = arith.constant 0 : index
    %c0_15 = arith.constant 0 : index
    %15 = vector.load %arg6[%c0_14, %c0_15] : memref<16x4xf32, #tpu.memory_space<vmem>>, vector<16x4xf32>
    %cst_16 = arith.constant dense<0.000000e+00> : vector<64x4xf32>
    %16 = tpu.matmul %2, %15, %cst_16 {dimension_numbers = #tpu.dot_dimension_numbers<[1], [0], [0], [1], [0, 0, 1, 1], [], []>} : vector<64x16xf32>, vector<16x4xf32>, vector<64x4xf32> -> vector<64x4xf32>
    %17 = vector.shape_cast %16 : vector<64x4xf32> to vector<4x16x4xf32>
    %18 = vector.shape_cast %14 : vector<4x16xf32> to vector<1x4x16xf32>
    %19 = vector.shape_cast %18 : vector<1x4x16xf32> to vector<1x4x16xf32>
    %20 = vector.broadcast %19 : vector<1x4x16xf32> to vector<4x4x16xf32>
    "tpu.trace_start"() <{level = 10 : i32, message = "coh,chw->cow"}> : () -> ()
    %cst_17 = arith.constant dense<0.000000e+00> : vector<4x4x4xf32>
    %21 = tpu.matmul %20, %17, %cst_17 {dimension_numbers = #tpu.dot_dimension_numbers<[2], [1], [1], [2], [0, 0, 0, 1, 1, 2], [0], [0]>} : vector<4x4x16xf32>, vector<4x16x4xf32>, vector<4x4x4xf32> -> vector<4x4x4xf32>
    "tpu.trace_stop"() : () -> ()
    %c0_18 = arith.constant 0 : index
    %c0_19 = arith.constant 0 : index
    %c0_20 = arith.constant 0 : index
    %c0_21 = arith.constant 0 : index
    %22 = vector.load %arg8[%c0_18, %c0_19, %c0_20, %c0_21] : memref<1x4x4x4xf32, #tpu.memory_space<vmem>>, vector<1x4x4x4xf32>
    %23 = vector.shape_cast %22 : vector<1x4x4x4xf32> to vector<4x4x4xf32>
    %24 = vector.shape_cast %21 : vector<4x4x4xf32> to vector<1x4x4x4xf32>
    tpu.vector_store %arg8[%c0_18, %c0_19, %c0_20, %c0_21], %24 {strides = array<i32>} : memref<1x4x4x4xf32, #tpu.memory_space<vmem>>, vector<1x4x4x4xf32>,
    return
  }
  func.func @transform_0(%arg0: i32, %arg1: i32) -> (i32, i32, i32, i32) {
    %c0_i32 = arith.constant 0 : i32
    %c0_i32_0 = arith.constant 0 : i32
    %c0_i32_1 = arith.constant 0 : i32
    return %arg0, %arg1, %c0_i32, %c0_i32_0 : i32, i32, i32, i32
  }
  func.func @transform_1(%arg0: i32, %arg1: i32) -> (i32, i32) {
    %c0_i32 = arith.constant 0 : i32
    %c0_i32_0 = arith.constant 0 : i32
    %c0_i32_1 = arith.constant 0 : i32
    return %c0_i32, %c0_i32_0 : i32, i32
  }
  func.func @transform_2(%arg0: i32, %arg1: i32) -> (i32, i32) {
    %c0_i32 = arith.constant 0 : i32
    %c0_i32_0 = arith.constant 0 : i32
    %c0_i32_1 = arith.constant 0 : i32
    return %c0_i32, %c0_i32_0 : i32, i32
  }
  func.func @transform_3(%arg0: i32, %arg1: i32) -> (i32, i32) {
    %c0_i32 = arith.constant 0 : i32
    %c0_i32_0 = arith.constant 0 : i32
    %c0_i32_1 = arith.constant 0 : i32
    return %c0_i32, %c0_i32_0 : i32, i32
  }
  func.func @transform_4(%arg0: i32, %arg1: i32) -> (i32, i32) {
    %c0_i32 = arith.constant 0 : i32
    %c0_i32_0 = arith.constant 0 : i32
    %c0_i32_1 = arith.constant 0 : i32
    return %c0_i32, %c0_i32_0 : i32, i32
  }
  func.func @transform_5(%arg0: i32, %arg1: i32) -> (i32, i32, i32, i32) {
    %c0_i32 = arith.constant 0 : i32
    %c0_i32_0 = arith.constant 0 : i32
    %c0_i32_1 = arith.constant 0 : i32
    return %arg0, %arg1, %c0_i32, %c0_i32_0 : i32, i32, i32, i32
  }
  func.func @transform_6(%arg0: i32, %arg1: i32) -> (i32, i32, i32, i32) {
    %c0_i32 = arith.constant 0 : i32
    %c0_i32_0 = arith.constant 0 : i32
    %c0_i32_1 = arith.constant 0 : i32
    return %arg0, %arg1, %c0_i32, %c0_i32_0 : i32, i32, i32, i32
  }
}

</mosaic_0001>

<llo_original>
// kernel: tpu_custom_call.1
$region0: #{tpu_custom_call.1}
  #allocation0 [shape = 'u32[]', space=smem, size = 0x4, offset = 0x4, fixed_abs, tag = 'smem constant byte address 0x4 - core index']
  #allocation1 [shape = 'u32[72,128]{1,0:T(1,128)}', space=vmem, size = 0x9000, scoped, tag = 'internal scratch']
  %s0 = inlined_call_operand.hbm [shape: f32[2,4,16,16], index: 0, kind: input, shape index: {}]
  %s1 = inlined_call_operand.vmem [shape: f32[8,16], index: 1, kind: input, shape index: {}]
  %s2 = inlined_call_operand.vmem [shape: f32[16,8], index: 2, kind: input, shape index: {}]
  %s3 = inlined_call_operand.vmem [shape: f32[4,16], index: 3, kind: input, shape index: {}]
  %s4 = inlined_call_operand.vmem [shape: f32[16,4], index: 4, kind: input, shape index: {}]
  %s5 = inlined_call_operand.hbm [shape: f32[2,4,8,8], index: 5, kind: output, shape index: {0}]
  %s6 = inlined_call_operand.hbm [shape: f32[2,4,4,4], index: 6, kind: output, shape index: {1}]
  %7 = xla_tuple %s5, %s6
  %s8 = sld [smem:[#allocation0]]
  $region65: #{tpu_custom_call.1} parent=0
    _
  %s10 = ssub.s32 1, %s8
  %s11 = scalar_select 0, %s10, %s8
  $region1: #{tpu_custom_call.1} parent=0
    #allocation2 [shape = 'u8[65536]{0}', space=vmem, size = 0x10000, scoped, tag = 'input window, operand 0']
    #allocation3 [shape = 's32[2]{0}', space=sflag, size = 0x8, scoped, tag = 'scoped memory for tpu_custom_call.1']
    #allocation4 [shape = 's32[2]{0}', space=sflag, size = 0x8, scoped, tag = 'scoped memory for tpu_custom_call.1']
    #allocation5 [shape = 'u8[32768]{0}', space=vmem, size = 0x8000, scoped, tag = 'output window, operand 0']
    #allocation6 [shape = 'u8[16384]{0}', space=vmem, size = 0x4000, scoped, tag = 'output window, operand 1']
    #allocation7 [shape = 's32[2]{0}', space=sflag, size = 0x8, scoped, tag = 'scoped memory for tpu_custom_call.1']
    %12 = vsyncpa [#allocation3], 0
    %s13 = scalar_lea.sflag [#allocation3], 1
    %14 = vsyncpa %s13, 0
    %15 = vsyncpa [#allocation4], 0
    %s16 = scalar_lea.sflag [#allocation4], 1
    %17 = vsyncpa %s16, 0
    %18 = vsyncpa [#allocation7], 0
    %s19 = scalar_lea.sflag [#allocation7], 1
    %20 = vsyncpa %s19, 0
    loop: start=0, step=1, limit=4
    $region2: #{tpu_custom_call.1} parent=1 // loop_pre_header
      _
    $region3: #{tpu_custom_call.1} parent=1 // loop_header
      %s22 = sphi 0, %s26
      %p23 = scmp.ge.s32.totalorder %s22, 4
      %s29 = sphi 0, %s41
      %s30 = sphi 0, %s37
      %s31 = sphi 0, %s29
      %s32 = sphi 0, %s30
      %s33 = sphi 0, %s31
      %s34 = sphi 0, %s32
      %s46 = sphi 0, %s48
      %s49 = sphi 0, %s46
      %s50 = sphi 0, %s49
      %s66 = sphi 0, %s50
      %s70 = sphi 0, %s70
      %s72 = sphi 0, %s70
      %s73 = sphi 0, %s72
      %s87 = sphi 0, %s73
      %s91 = sphi 0, %s91
      %s93 = sphi 0, %s91
      %s94 = sphi 0, %s93
      %s108 = sphi 0, %s94
      %s112 = sphi 0, %s112
      %s114 = sphi 0, %s112
      %s115 = sphi 0, %s114
      %s129 = sphi 0, %s115
      %s133 = sphi 0, %s133
      %s135 = sphi 0, %s133
      %s136 = sphi 0, %s135
      %s150 = sphi 0, %s136
      %s158 = sphi 0, %s160
      %s161 = sphi 0, %s158
      %s162 = sphi 0, %s161
      %s178 = sphi 0, %s162
      %s186 = sphi 0, %s188
      %s189 = sphi 0, %s186
      %s190 = sphi 0, %s189
      %s206 = sphi 0, %s190
    $region4: #{tpu_custom_call.1} parent=1 // loop_header_branch
      %25 = sbr.rel (%p23) target = $region8
    $region5: #{tpu_custom_call.1} parent=1 // loop_body
      %s27 = ssub.s32 %s22, 1
      %s28 = ssub.s32 %s22, 2
      %s35 = sadd.s32 1, %s30
      %p36 = scmp.ge.s32.totalorder %s35, 1
      %s37 = scalar_select %p36, 0, %s35
      %s38 = sadd.s32 1, %s29
      %s39 = scalar_select %p36, %s38, %s29
      %p40 = scmp.ge.s32.totalorder %s39, 2
      %s41 = scalar_select %p40, 0, %s39
      %s42 = ssub.s32 %s29, %s41
      %s43 = ssub.s32 %s30, %s37
      %s44 = sor.u32 %s42, %s43
      %p45 = scmp.eq.s32.totalorder %s44, 0
      %s47 = sadd.s32 %s46, 1
      %s48 = scalar_select %p45, %s46, %s47
      %p51 = pneg %p45
      %p52 = scmp.eq.s32.totalorder %s22, 1
      %p53 = por %p51, %p52
      %p54 = scmp.ne.s32.totalorder %s46, %s49
      %p55 = scmp.eq.s32.totalorder %s22, 0
      %p56 = por %p54, %p55
      %p57 = scmp.ne.s32.totalorder %s46, %s49
      %p58 = scmp.eq.s32.totalorder %s27, 1
      %p59 = por %p57, %p58
      %p60 = scmp.ne.s32.totalorder %s49, %s50
      %p61 = scmp.eq.s32.totalorder %s27, 0
      %p62 = por %p60, %p61
      %p63 = scmp.ne.s32.totalorder %s49, %s50
      %p64 = scmp.eq.s32.totalorder %s28, 1
      %p65 = por %p63, %p64
      %p67 = scmp.ne.s32.totalorder %s50, %s66
      %p68 = scmp.eq.s32.totalorder %s28, 0
      %p69 = por %p67, %p68
      %s71 = sadd.s32 %s70, 1
      %p74 = scmp.eq.s32.totalorder %s22, 1
      %p75 = scmp.ne.s32.totalorder %s70, %s72
      %p76 = scmp.eq.s32.totalorder %s22, 0
      %p77 = por %p75, %p76
      %p78 = scmp.ne.s32.totalorder %s70, %s72
      %p79 = scmp.eq.s32.totalorder %s27, 1
      %p80 = por %p78, %p79
      %p81 = scmp.ne.s32.totalorder %s72, %s73
      %p82 = scmp.eq.s32.totalorder %s27, 0
      %p83 = por %p81, %p82
      %p84 = scmp.ne.s32.totalorder %s72, %s73
      %p85 = scmp.eq.s32.totalorder %s28, 1
      %p86 = por %p84, %p85
      %p88 = scmp.ne.s32.totalorder %s73, %s87
      %p89 = scmp.eq.s32.totalorder %s28, 0
      %p90 = por %p88, %p89
      %s92 = sadd.s32 %s91, 1
      %p95 = scmp.eq.s32.totalorder %s22, 1
      %p96 = scmp.ne.s32.totalorder %s91, %s93
      %p97 = scmp.eq.s32.totalorder %s22, 0
      %p98 = por %p96, %p97
      %p99 = scmp.ne.s32.totalorder %s91, %s93
      %p100 = scmp.eq.s32.totalorder %s27, 1
      %p101 = por %p99, %p100
      %p102 = scmp.ne.s32.totalorder %s93, %s94
      %p103 = scmp.eq.s32.totalorder %s27, 0
      %p104 = por %p102, %p103
      %p105 = scmp.ne.s32.totalorder %s93, %s94
      %p106 = scmp.eq.s32.totalorder %s28, 1
      %p107 = por %p105, %p106
      %p109 = scmp.ne.s32.totalorder %s94, %s108
      %p110 = scmp.eq.s32.totalorder %s28, 0
      %p111 = por %p109, %p110
      %s113 = sadd.s32 %s112, 1
      %p116 = scmp.eq.s32.totalorder %s22, 1
      %p117 = scmp.ne.s32.totalorder %s112, %s114
      %p118 = scmp.eq.s32.totalorder %s22, 0
      %p119 = por %p117, %p118
      %p120 = scmp.ne.s32.totalorder %s112, %s114
      %p121 = scmp.eq.s32.totalorder %s27, 1
      %p122 = por %p120, %p121
      %p123 = scmp.ne.s32.totalorder %s114, %s115
      %p124 = scmp.eq.s32.totalorder %s27, 0
      %p125 = por %p123, %p124
      %p126 = scmp.ne.s32.totalorder %s114, %s115
      %p127 = scmp.eq.s32.totalorder %s28, 1
      %p128 = por %p126, %p127
      %p130 = scmp.ne.s32.totalorder %s115, %s129
      %p131 = scmp.eq.s32.totalorder %s28, 0
      %p132 = por %p130, %p131
      %s134 = sadd.s32 %s133, 1
      %p137 = scmp.eq.s32.totalorder %s22, 1
      %p138 = scmp.ne.s32.totalorder %s133, %s135
      %p139 = scmp.eq.s32.totalorder %s22, 0
      %p140 = por %p138, %p139
      %p141 = scmp.ne.s32.totalorder %s133, %s135
      %p142 = scmp.eq.s32.totalorder %s27, 1
      %p143 = por %p141, %p142
      %p144 = scmp.ne.s32.totalorder %s135, %s136
      %p145 = scmp.eq.s32.totalorder %s27, 0
      %p146 = por %p144, %p145
      %p147 = scmp.ne.s32.totalorder %s135, %s136
      %p148 = scmp.eq.s32.totalorder %s28, 1
      %p149 = por %p147, %p148
      %p151 = scmp.ne.s32.totalorder %s136, %s150
      %p152 = scmp.eq.s32.totalorder %s28, 0
      %p153 = por %p151, %p152
      %s154 = ssub.s32 %s29, %s41
      %s155 = ssub.s32 %s30, %s37
      %s156 = sor.u32 %s154, %s155
      %p157 = scmp.eq.s32.totalorder %s156, 0
      %s159 = sadd.s32 %s158, 1
      %s160 = scalar_select %p157, %s158, %s159
      %p163 = pneg %p157
      %p164 = scmp.eq.s32.totalorder %s22, 1
      %p165 = por %p163, %p164
      %p166 = scmp.ne.s32.totalorder %s158, %s161
      %p167 = scmp.eq.s32.totalorder %s22, 0
      %p168 = por %p166, %p167
      %p169 = scmp.ne.s32.totalorder %s158, %s161
      %p170 = scmp.eq.s32.totalorder %s27, 1
      %p171 = por %p169, %p170
      %p172 = scmp.ne.s32.totalorder %s161, %s162
      %p173 = scmp.eq.s32.totalorder %s27, 0
      %p174 = por %p172, %p173
      %p175 = scmp.ne.s32.totalorder %s161, %s162
      %p176 = scmp.eq.s32.totalorder %s28, 1
      %p177 = por %p175, %p176
      %p179 = scmp.ne.s32.totalorder %s162, %s178
      %p180 = scmp.eq.s32.totalorder %s28, 0
      %p181 = por %p179, %p180
      %s182 = ssub.s32 %s29, %s41
      %s183 = ssub.s32 %s30, %s37
      %s184 = sor.u32 %s182, %s183
      %p185 = scmp.eq.s32.totalorder %s184, 0
      %s187 = sadd.s32 %s186, 1
      %s188 = scalar_select %p185, %s186, %s187
      %p191 = pneg %p185
      %p192 = scmp.eq.s32.totalorder %s22, 1
      %p193 = por %p191, %p192
      %p194 = scmp.ne.s32.totalorder %s186, %s189
      %p195 = scmp.eq.s32.totalorder %s22, 0
      %p196 = por %p194, %p195
      %p197 = scmp.ne.s32.totalorder %s186, %s189
      %p198 = scmp.eq.s32.totalorder %s27, 1
      %p199 = por %p197, %p198
      %p200 = scmp.ne.s32.totalorder %s189, %s190
      %p201 = scmp.eq.s32.totalorder %s27, 0
      %p202 = por %p200, %p201
      %p203 = scmp.ne.s32.totalorder %s189, %s190
      %p204 = scmp.eq.s32.totalorder %s28, 1
      %p205 = por %p203, %p204
      %p207 = scmp.ne.s32.totalorder %s190, %s206
      %p208 = scmp.eq.s32.totalorder %s28, 0
      %p209 = por %p207, %p208
      %p210 = scmp.le.s32.totalorder 1, %s22
      %p211 = scmp.lt.s32.totalorder %s22, 3
      %p212 = pnand %p210, %p211
      %p213 = pneg %p212
      // Predicated region
      $region9: #{tpu_custom_call.1} parent=5 // pred_check
        _
      $region10: #{tpu_custom_call.1} parent=5 // pred_check_branch
        %215 = sbr.rel (%p212) target = $region12
      $region11: #{tpu_custom_call.1} parent=5 // pred_region
        %s216 = ssub.s32 %s22, 1
        // Predicated region
        $region13: #{tpu_custom_call.1} parent=11 // pred_check
          %p217 = pneg %p83
        $region14: #{tpu_custom_call.1} parent=11 // pred_check_branch
          %219 = sbr.rel (%p217) target = $region16
        $region15: #{tpu_custom_call.1} parent=11 // pred_region
          _
        $region16: #{tpu_custom_call.1} parent=11 // pred_fallthru
          _
        // Predicated region
        $region17: #{tpu_custom_call.1} parent=11 // pred_check
          %p220 = pneg %p104
        $region18: #{tpu_custom_call.1} parent=11 // pred_check_branch
          %222 = sbr.rel (%p220) target = $region20
        $region19: #{tpu_custom_call.1} parent=11 // pred_region
          _
        $region20: #{tpu_custom_call.1} parent=11 // pred_fallthru
          _
        // Predicated region
        $region21: #{tpu_custom_call.1} parent=11 // pred_check
          %p223 = pneg %p125
        $region22: #{tpu_custom_call.1} parent=11 // pred_check_branch
          %225 = sbr.rel (%p223) target = $region24
        $region23: #{tpu_custom_call.1} parent=11 // pred_region
          _
        $region24: #{tpu_custom_call.1} parent=11 // pred_fallthru
          _
        // Predicated region
        $region25: #{tpu_custom_call.1} parent=11 // pred_check
          %p226 = pneg %p146
        $region26: #{tpu_custom_call.1} parent=11 // pred_check_branch
          %228 = sbr.rel (%p226) target = $region28
        $region27: #{tpu_custom_call.1} parent=11 // pred_region
          _
        $region28: #{tpu_custom_call.1} parent=11 // pred_fallthru
          _
      $region12: #{tpu_custom_call.1} parent=5 // pred_fallthru
        _
      %p229 = scmp.lt.s32.totalorder %s22, 2
      // Predicated region
      $region29: #{tpu_custom_call.1} parent=5 // pred_check
        %p230 = pneg %p229
      $region30: #{tpu_custom_call.1} parent=5 // pred_check_branch
        %232 = sbr.rel (%p230) target = $region32
      $region31: #{tpu_custom_call.1} parent=5 // pred_region
        // Predicated region
        $region33: #{tpu_custom_call.1} parent=31 // pred_check
          %p233 = pneg %p56
        $region34: #{tpu_custom_call.1} parent=31 // pred_check_branch
          %235 = sbr.rel (%p233) target = $region36
        $region35: #{tpu_custom_call.1} parent=31 // pred_region
          %s236 = sand.u32 %s46, 1
          %s237 = scalar_lea.sflag [#allocation3], %s236
          %s238 = sand.u32 %s46, 1
          %s239 = smul.addr %s238, 64
          %s240 = scalar_lea.vmem [#allocation2], %s239
          %s241 = smul.u32 4, %s30
          %243 = vsyncadd %s237, 0
          %s244 = smul.addr %s241, 2
          %s245 = smul.addr %s29, 8
          %s246 = sadd.s32 %s244, %s245
          %s247 = smul.addr %s246, 8
          %s248 = scalar_lea.hbm %s0, %s247
          %s249 = sshll.u32 %s248, 4
          %s250 = int_to_ptr.hbm [resolvable:$true] %s249
          %s251 = sshll.u32 %s240, 4
          %s252 = int_to_ptr.vmem [resolvable:$true] %s251
          %257 = dma.hbm_to_vmem [thread:$0]  %s250, 1024, %s252, %s237, 128, 128, 8
        $region36: #{tpu_custom_call.1} parent=31 // pred_fallthru
          _
      $region32: #{tpu_custom_call.1} parent=5 // pred_fallthru
        _
      %p258 = scmp.le.s32.totalorder 1, %s22
      %p259 = scmp.lt.s32.totalorder %s22, 3
      %p260 = pnand %p258, %p259
      %p261 = pneg %p260
      // Predicated region
      $region37: #{tpu_custom_call.1} parent=5 // pred_check
        _
      $region38: #{tpu_custom_call.1} parent=5 // pred_check_branch
        %263 = sbr.rel (%p260) target = $region40
      $region39: #{tpu_custom_call.1} parent=5 // pred_region
        %s264 = ssub.s32 %s22, 1
        %s265 = sand.u32 %s49, 1
        %s266 = scalar_lea.sflag [#allocation3], %s265
        %s267 = sand.u32 %s49, 1
        %s268 = smul.addr %s267, 64
        %s269 = scalar_lea.vmem [#allocation2], %s268
        // Predicated region
        $region41: #{tpu_custom_call.1} parent=39 // pred_check
          %p270 = pneg %p62
        $region42: #{tpu_custom_call.1} parent=39 // pred_check_branch
          %272 = sbr.rel (%p270) target = $region44
        $region43: #{tpu_custom_call.1} parent=39 // pred_region
          %274 = dma.done %s266, 1024
        $region44: #{tpu_custom_call.1} parent=39 // pred_fallthru
          _
        %s275 = sand.u32 %s49, 1
        %s276 = scalar_lea.sflag [#allocation3], %s275
        %s277 = sand.u32 %s49, 1
        %s278 = smul.addr %s277, 64
        %s279 = scalar_lea.vmem [#allocation2], %s278
        %p280 = pneg %p62
        %p281 = pneg %p59
        %p282 = pneg %p83
        %p283 = pneg %p80
        %p284 = pneg %p104
        %p285 = pneg %p101
        %p286 = pneg %p125
        %p287 = pneg %p122
        %p288 = pneg %p146
        %p289 = pneg %p143
        %p290 = pneg %p174
        %p291 = pneg %p171
        %s292 = sand.u32 %s161, 1
        %s293 = scalar_lea.sflag [#allocation4], %s292
        %s294 = sand.u32 %s161, 1
        %s295 = smul.addr %s294, 32
        %s296 = scalar_lea.vmem [#allocation5], %s295
        %p297 = pneg %p202
        %p298 = pneg %p199
        %s299 = sand.u32 %s189, 1
        %s300 = scalar_lea.sflag [#allocation7], %s299
        %s301 = sand.u32 %s189, 1
        %s302 = smul.addr %s301, 16
        %s303 = scalar_lea.vmem [#allocation6], %s302
        %s304 = smul.u32 4, %s32
        %s305 = smul.u32 4, %s32
        %s306 = smul.u32 4, %s32
        %v307 = vld [vmem:[%s269] sm:$0xff]
        %v308 = vld [vmem:[%s269 + $0x8] sm:$0xff]
        %v309 = vld [vmem:[%s269 + $0x10] sm:$0xff]
        %v310 = vld [vmem:[%s269 + $0x18] sm:$0xff]
        %v311 = vld [vmem:[%s269 + $0x20] sm:$0xff]
        %v312 = vld [vmem:[%s269 + $0x28] sm:$0xff]
        %v313 = vld [vmem:[%s269 + $0x30] sm:$0xff]
        %v314 = vld [vmem:[%s269 + $0x38] sm:$0xff]
        %v315 = vld [vmem:[%s1] sm:$0xff]
        %v316 = vld [vmem:[%s2] sm:$0xff]
        %v317 = vld [vmem:[%s2 + $0x8] sm:$0xff]
        %vm318 = vcmask 130048
        %v320 = vsel %vm318, %v307, 0
        %v323 = vsel %vm318, %v308, 0
        %v326 = vsel %vm318, %v309, 0
        %v329 = vsel %vm318, %v310, 0
        %v332 = vsel %vm318, %v311, 0
        %v335 = vsel %vm318, %v312, 0
        %v338 = vsel %vm318, %v313, 0
        %v341 = vsel %vm318, %v314, 0
        %343 = vmatpush.msra.mxu0 0.0
        %344 = vmatpush.msra.mxu0 0.0
        %345 = vmatpush.msra.mxu0 0.0
        %346 = vmatpush.msra.mxu0 0.0
        %347 = vmatpush.msra.mxu0 0.0
        %348 = vmatpush.msra.mxu0 0.0
        %349 = vmatpush.msra.mxu0 0.0
        %350 = vmatpush.msra.mxu0 0.0
        %351 = vmatpush.msra.mxu0 0.0
        %352 = vmatpush.msra.mxu0 0.0
        %353 = vmatpush.msra.mxu0 0.0
        %354 = vmatpush.msra.mxu0 0.0
        %355 = vmatpush.msra.mxu0 0.0
        %356 = vmatpush.msra.mxu0 0.0
        %357 = vmatpush.msra.mxu0 %v317
        %358 = vmatpush.msra.mxu0 %v316
        %359 = vmatmul.f32.gmra.mxu0 %v320
        %v360 = vpop.f32.mrf.mxu0
        %v361 = vadd.f32 0.0, %v360
        %362 = vmatmul.f32.gmra.mxu0 %v323
        %v363 = vpop.f32.mrf.mxu0
        %v364 = vadd.f32 0.0, %v363
        %365 = vmatmul.f32.gmra.mxu0 %v326
        %v366 = vpop.f32.mrf.mxu0
        %v367 = vadd.f32 0.0, %v366
        %368 = vmatmul.f32.gmra.mxu0 %v329
        %v369 = vpop.f32.mrf.mxu0
        %v370 = vadd.f32 0.0, %v369
        %371 = vmatmul.f32.gmra.mxu0 %v332
        %v372 = vpop.f32.mrf.mxu0
        %v373 = vadd.f32 0.0, %v372
        %374 = vmatmul.f32.gmra.mxu0 %v335
        %v375 = vpop.f32.mrf.mxu0
        %v376 = vadd.f32 0.0, %v375
        %377 = vmatmul.f32.gmra.mxu0 %v338
        %v378 = vpop.f32.mrf.mxu0
        %v379 = vadd.f32 0.0, %v378
        %380 = vmatmul.f32.gmra.mxu0 %v341
        %v381 = vpop.f32.mrf.mxu0
        %v382 = vadd.f32 0.0, %v381
        %383 = vdwg.mxu0
        %v385 = vsel %vm318, %v315, 0
        %387 = vmatpush.msra.mxu0 0.0
        %388 = vmatpush.msra.mxu0 0.0
        %389 = vmatpush.msra.mxu0 0.0
        %390 = vmatpush.msra.mxu0 0.0
        %391 = vmatpush.msra.mxu0 0.0
        %392 = vmatpush.msra.mxu0 0.0
        %393 = vmatpush.msra.mxu0 0.0
        %394 = vmatpush.msra.mxu0 0.0
        %395 = vmatpush.msra.mxu0 0.0
        %396 = vmatpush.msra.mxu0 0.0
        %397 = vmatpush.msra.mxu0 0.0
        %398 = vmatpush.msra.mxu0 0.0
        %399 = vmatpush.msra.mxu0 0.0
        %400 = vmatpush.msra.mxu0 0.0
        %401 = vmatpush.msra.mxu0 %v364
        %402 = vmatpush.msra.mxu0 %v361
        %403 = vmatmul.f32.gmra.mxu0 %v385
        %v404 = vpop.f32.mrf.mxu0
        %v405 = vadd.f32 0.0, %v404
        %406 = vdwg.mxu0
        %407 = vmatpush.msra.mxu0 0.0
        %408 = vmatpush.msra.mxu0 0.0
        %409 = vmatpush.msra.mxu0 0.0
        %410 = vmatpush.msra.mxu0 0.0
        %411 = vmatpush.msra.mxu0 0.0
        %412 = vmatpush.msra.mxu0 0.0
        %413 = vmatpush.msra.mxu0 0.0
        %414 = vmatpush.msra.mxu0 0.0
        %415 = vmatpush.msra.mxu0 0.0
        %416 = vmatpush.msra.mxu0 0.0
        %417 = vmatpush.msra.mxu0 0.0
        %418 = vmatpush.msra.mxu0 0.0
        %419 = vmatpush.msra.mxu0 0.0
        %420 = vmatpush.msra.mxu0 0.0
        %421 = vmatpush.msra.mxu0 %v370
        %422 = vmatpush.msra.mxu0 %v367
        %423 = vmatmul.f32.gmra.mxu0 %v385
        %v424 = vpop.f32.mrf.mxu0
        %v425 = vadd.f32 0.0, %v424
        %426 = vdwg.mxu0
        %427 = vmatpush.msra.mxu0 0.0
        %428 = vmatpush.msra.mxu0 0.0
        %429 = vmatpush.msra.mxu0 0.0
        %430 = vmatpush.msra.mxu0 0.0
        %431 = vmatpush.msra.mxu0 0.0
        %432 = vmatpush.msra.mxu0 0.0
        %433 = vmatpush.msra.mxu0 0.0
        %434 = vmatpush.msra.mxu0 0.0
        %435 = vmatpush.msra.mxu0 0.0
        %436 = vmatpush.msra.mxu0 0.0
        %437 = vmatpush.msra.mxu0 0.0
        %438 = vmatpush.msra.mxu0 0.0
        %439 = vmatpush.msra.mxu0 0.0
        %440 = vmatpush.msra.mxu0 0.0
        %441 = vmatpush.msra.mxu0 %v376
        %442 = vmatpush.msra.mxu0 %v373
        %443 = vmatmul.f32.gmra.mxu0 %v385
        %v444 = vpop.f32.mrf.mxu0
        %v445 = vadd.f32 0.0, %v444
        %446 = vdwg.mxu0
        %447 = vmatpush.msra.mxu0 0.0
        %448 = vmatpush.msra.mxu0 0.0
        %449 = vmatpush.msra.mxu0 0.0
        %450 = vmatpush.msra.mxu0 0.0
        %451 = vmatpush.msra.mxu0 0.0
        %452 = vmatpush.msra.mxu0 0.0
        %453 = vmatpush.msra.mxu0 0.0
        %454 = vmatpush.msra.mxu0 0.0
        %455 = vmatpush.msra.mxu0 0.0
        %456 = vmatpush.msra.mxu0 0.0
        %457 = vmatpush.msra.mxu0 0.0
        %458 = vmatpush.msra.mxu0 0.0
        %459 = vmatpush.msra.mxu0 0.0
        %460 = vmatpush.msra.mxu0 0.0
        %461 = vmatpush.msra.mxu0 %v382
        %462 = vmatpush.msra.mxu0 %v379
        %463 = vmatmul.f32.gmra.mxu0 %v385
        %v464 = vpop.f32.mrf.mxu0
        %v465 = vadd.f32 0.0, %v464
        %466 = vdwg.mxu0
        %vm467 = vcmask 64512
        %468 = vst.msk [vmem:[%s296] sm:$0xff] %vm467, %v405
        %469 = vst.msk [vmem:[%s296 + $0x8] sm:$0xff] %vm467, %v425
        %470 = vst.msk [vmem:[%s296 + $0x10] sm:$0xff] %vm467, %v445
        %471 = vst.msk [vmem:[%s296 + $0x18] sm:$0xff] %vm467, %v465
        %v472 = vld [vmem:[%s3] sm:$0xf]
        %v473 = vld [vmem:[%s4] sm:$0xff]
        %v474 = vld [vmem:[%s4 + $0x8] sm:$0xff]
        %475 = vmatpush.msra.mxu0 0.0
        %476 = vmatpush.msra.mxu0 0.0
        %477 = vmatpush.msra.mxu0 0.0
        %478 = vmatpush.msra.mxu0 0.0
        %479 = vmatpush.msra.mxu0 0.0
        %480 = vmatpush.msra.mxu0 0.0
        %481 = vmatpush.msra.mxu0 0.0
        %482 = vmatpush.msra.mxu0 0.0
        %483 = vmatpush.msra.mxu0 0.0
        %484 = vmatpush.msra.mxu0 0.0
        %485 = vmatpush.msra.mxu0 0.0
        %486 = vmatpush.msra.mxu0 0.0
        %487 = vmatpush.msra.mxu0 0.0
        %488 = vmatpush.msra.mxu0 0.0
        %489 = vmatpush.msra.mxu0 %v474
        %490 = vmatpush.msra.mxu0 %v473
        %491 = vmatmul.f32.gmra.mxu0 %v320
        %v492 = vpop.f32.mrf.mxu0
        %v493 = vadd.f32 0.0, %v492
        %494 = vmatmul.f32.gmra.mxu0 %v323
        %v495 = vpop.f32.mrf.mxu0
        %v496 = vadd.f32 0.0, %v495
        %497 = vmatmul.f32.gmra.mxu0 %v326
        %v498 = vpop.f32.mrf.mxu0
        %v499 = vadd.f32 0.0, %v498
        %500 = vmatmul.f32.gmra.mxu0 %v329
        %v501 = vpop.f32.mrf.mxu0
        %v502 = vadd.f32 0.0, %v501
        %503 = vmatmul.f32.gmra.mxu0 %v332
        %v504 = vpop.f32.mrf.mxu0
        %v505 = vadd.f32 0.0, %v504
        %506 = vmatmul.f32.gmra.mxu0 %v335
        %v507 = vpop.f32.mrf.mxu0
        %v508 = vadd.f32 0.0, %v507
        %509 = vmatmul.f32.gmra.mxu0 %v338
        %v510 = vpop.f32.mrf.mxu0
        %v511 = vadd.f32 0.0, %v510
        %512 = vmatmul.f32.gmra.mxu0 %v341
        %v513 = vpop.f32.mrf.mxu0
        %v514 = vadd.f32 0.0, %v513
        %515 = vdwg.mxu0
        %v517 = vsel %vm318, %v472, 0
        %519 = vmatpush.msra.mxu0 0.0
        %520 = vmatpush.msra.mxu0 0.0
        %521 = vmatpush.msra.mxu0 0.0
        %522 = vmatpush.msra.mxu0 0.0
        %523 = vmatpush.msra.mxu0 0.0
        %524 = vmatpush.msra.mxu0 0.0
        %525 = vmatpush.msra.mxu0 0.0
        %526 = vmatpush.msra.mxu0 0.0
        %527 = vmatpush.msra.mxu0 0.0
        %528 = vmatpush.msra.mxu0 0.0
        %529 = vmatpush.msra.mxu0 0.0
        %530 = vmatpush.msra.mxu0 0.0
        %531 = vmatpush.msra.mxu0 0.0
        %532 = vmatpush.msra.mxu0 0.0
        %533 = vmatpush.msra.mxu0 %v496
        %534 = vmatpush.msra.mxu0 %v493
        %535 = vmatmul.f32.gmra.mxu0 %v517
        %v536 = vpop.f32.mrf.mxu0
        %v537 = vadd.f32 0.0, %v536
        %538 = vdwg.mxu0
        %539 = vmatpush.msra.mxu0 0.0
        %540 = vmatpush.msra.mxu0 0.0
        %541 = vmatpush.msra.mxu0 0.0
        %542 = vmatpush.msra.mxu0 0.0
        %543 = vmatpush.msra.mxu0 0.0
        %544 = vmatpush.msra.mxu0 0.0
        %545 = vmatpush.msra.mxu0 0.0
        %546 = vmatpush.msra.mxu0 0.0
        %547 = vmatpush.msra.mxu0 0.0
        %548 = vmatpush.msra.mxu0 0.0
        %549 = vmatpush.msra.mxu0 0.0
        %550 = vmatpush.msra.mxu0 0.0
        %551 = vmatpush.msra.mxu0 0.0
        %552 = vmatpush.msra.mxu0 0.0
        %553 = vmatpush.msra.mxu0 %v502
        %554 = vmatpush.msra.mxu0 %v499
        %555 = vmatmul.f32.gmra.mxu0 %v517
        %v556 = vpop.f32.mrf.mxu0
        %v557 = vadd.f32 0.0, %v556
        %558 = vdwg.mxu0
        %559 = vmatpush.msra.mxu0 0.0
        %560 = vmatpush.msra.mxu0 0.0
        %561 = vmatpush.msra.mxu0 0.0
        %562 = vmatpush.msra.mxu0 0.0
        %563 = vmatpush.msra.mxu0 0.0
        %564 = vmatpush.msra.mxu0 0.0
        %565 = vmatpush.msra.mxu0 0.0
        %566 = vmatpush.msra.mxu0 0.0
        %567 = vmatpush.msra.mxu0 0.0
        %568 = vmatpush.msra.mxu0 0.0
        %569 = vmatpush.msra.mxu0 0.0
        %570 = vmatpush.msra.mxu0 0.0
        %571 = vmatpush.msra.mxu0 0.0
        %572 = vmatpush.msra.mxu0 0.0
        %573 = vmatpush.msra.mxu0 %v508
        %574 = vmatpush.msra.mxu0 %v505
        %575 = vmatmul.f32.gmra.mxu0 %v517
        %v576 = vpop.f32.mrf.mxu0
        %v577 = vadd.f32 0.0, %v576
        %578 = vdwg.mxu0
        %579 = vmatpush.msra.mxu0 0.0
        %580 = vmatpush.msra.mxu0 0.0
        %581 = vmatpush.msra.mxu0 0.0
        %582 = vmatpush.msra.mxu0 0.0
        %583 = vmatpush.msra.mxu0 0.0
        %584 = vmatpush.msra.mxu0 0.0
        %585 = vmatpush.msra.mxu0 0.0
        %586 = vmatpush.msra.mxu0 0.0
        %587 = vmatpush.msra.mxu0 0.0
        %588 = vmatpush.msra.mxu0 0.0
        %589 = vmatpush.msra.mxu0 0.0
        %590 = vmatpush.msra.mxu0 0.0
        %591 = vmatpush.msra.mxu0 0.0
        %592 = vmatpush.msra.mxu0 0.0
        %593 = vmatpush.msra.mxu0 %v514
        %594 = vmatpush.msra.mxu0 %v511
        %595 = vmatmul.f32.gmra.mxu0 %v517
        %v596 = vpop.f32.mrf.mxu0
        %v597 = vadd.f32 0.0, %v596
        %598 = vdwg.mxu0
        %vm599 = vcmask 27648
        %600 = vst.msk [vmem:[%s303] sm:$0xf] %vm599, %v537
        %601 = vst.msk [vmem:[%s303 + $0x4] sm:$0xf] %vm599, %v557
        %602 = vst.msk [vmem:[%s303 + $0x8] sm:$0xf] %vm599, %v577
        %603 = vst.msk [vmem:[%s303 + $0xc] sm:$0xf] %vm599, %v597
        %s604 = sand.u32 %s161, 1
        %s605 = scalar_lea.sflag [#allocation4], %s604
        %s606 = sand.u32 %s161, 1
        %s607 = smul.addr %s606, 32
        %s608 = scalar_lea.vmem [#allocation5], %s607
        %s609 = sand.u32 %s189, 1
        %s610 = scalar_lea.sflag [#allocation7], %s609
        %s611 = sand.u32 %s189, 1
        %s612 = smul.addr %s611, 16
        %s613 = scalar_lea.vmem [#allocation6], %s612
        // Predicated region
        $region45: #{tpu_custom_call.1} parent=39 // pred_check
          %p614 = pneg %p171
        $region46: #{tpu_custom_call.1} parent=39 // pred_check_branch
          %616 = sbr.rel (%p614) target = $region48
        $region47: #{tpu_custom_call.1} parent=39 // pred_region
          %s617 = smul.u32 4, %s32
          %619 = vsyncadd %s605, 0
          %s620 = smul.addr %s31, 4
          %s621 = sadd.s32 %s617, %s620
          %s622 = smul.addr %s621, 8
          %s623 = scalar_lea.hbm %s5, %s622
          %s624 = sshll.u32 %s608, 4
          %s625 = int_to_ptr.vmem [resolvable:$true] %s624
          %s626 = sshll.u32 %s623, 4
          %s627 = int_to_ptr.hbm [resolvable:$true] %s626
          %632 = dma.vmem_to_hbm [thread:$0]  %s625, 512, %s627, %s605, 128, 128, 8
        $region48: #{tpu_custom_call.1} parent=39 // pred_fallthru
          _
        // Predicated region
        $region49: #{tpu_custom_call.1} parent=39 // pred_check
          %p633 = pneg %p199
        $region50: #{tpu_custom_call.1} parent=39 // pred_check_branch
          %635 = sbr.rel (%p633) target = $region52
        $region51: #{tpu_custom_call.1} parent=39 // pred_region
          %s636 = smul.u32 4, %s32
          %638 = vsyncadd %s610, 0
          %s639 = smul.addr %s31, 4
          %s640 = sadd.s32 %s636, %s639
          %s641 = smul.addr %s640, 4
          %s642 = scalar_lea.hbm %s6, %s641
          %s643 = sshll.u32 %s613, 4
          %s644 = int_to_ptr.vmem [resolvable:$true] %s643
          %s645 = sshll.u32 %s642, 4
          %s646 = int_to_ptr.hbm [resolvable:$true] %s645
          %651 = dma.vmem_to_hbm [thread:$0]  %s644, 256, %s646, %s610, 64, 64, 4
        $region52: #{tpu_custom_call.1} parent=39 // pred_fallthru
          _
      $region40: #{tpu_custom_call.1} parent=5 // pred_fallthru
        _
      %p652 = scmp.le.s32.totalorder 2, %s22
      // Predicated region
      $region53: #{tpu_custom_call.1} parent=5 // pred_check
        %p653 = pneg %p652
      $region54: #{tpu_custom_call.1} parent=5 // pred_check_branch
        %655 = sbr.rel (%p653) target = $region56
      $region55: #{tpu_custom_call.1} parent=5 // pred_region
        %s656 = ssub.s32 %s22, 2
        // Predicated region
        $region57: #{tpu_custom_call.1} parent=55 // pred_check
          %p657 = pneg %p177
        $region58: #{tpu_custom_call.1} parent=55 // pred_check_branch
          %659 = sbr.rel (%p657) target = $region60
        $region59: #{tpu_custom_call.1} parent=55 // pred_region
          %s660 = sand.u32 %s162, 1
          %s661 = scalar_lea.sflag [#allocation4], %s660
          %s662 = sand.u32 %s162, 1
          %s663 = smul.addr %s662, 32
          %s664 = scalar_lea.vmem [#allocation5], %s663
          %666 = dma.done %s661, 512
        $region60: #{tpu_custom_call.1} parent=55 // pred_fallthru
          _
        // Predicated region
        $region61: #{tpu_custom_call.1} parent=55 // pred_check
          %p667 = pneg %p205
        $region62: #{tpu_custom_call.1} parent=55 // pred_check_branch
          %669 = sbr.rel (%p667) target = $region64
        $region63: #{tpu_custom_call.1} parent=55 // pred_region
          %s670 = sand.u32 %s190, 1
          %s671 = scalar_lea.sflag [#allocation7], %s670
          %s672 = sand.u32 %s190, 1
          %s673 = smul.addr %s672, 16
          %s674 = scalar_lea.vmem [#allocation6], %s673
          %676 = dma.done %s671, 256
        $region64: #{tpu_custom_call.1} parent=55 // pred_fallthru
          _
      $region56: #{tpu_custom_call.1} parent=5 // pred_fallthru
        _
    $region6: #{tpu_custom_call.1} parent=1 // loop_footer
      %s26 = sadd.s32 1, %s22
    $region7: #{tpu_custom_call.1} parent=1 // loop_footer_branch
      %21 = sbr.rel target = $region3
    $region8: #{tpu_custom_call.1} parent=1 // loop_exit
      _
    %677 = vsyncpa [#allocation3], 1
    %s678 = scalar_lea.sflag [#allocation3], 1
    %679 = vsyncpa %s678, 1
    %680 = vsyncpa [#allocation4], 1
    %s681 = scalar_lea.sflag [#allocation4], 1
    %682 = vsyncpa %s681, 1
    %683 = vsyncpa [#allocation7], 1
    %s684 = scalar_lea.sflag [#allocation7], 1
    %685 = vsyncpa %s684, 1

</llo_original>
